<compile_context>
chip_gen: v7x
topology: tpu7x:2x2x1
jax: 0.10.0
libtpu: 0.0.40
codegen_flags: <defaults>
</compile_context>

<pallas_src>
import functools

import jax
import jax.numpy as jnp
from jax.experimental import pallas as pl
from jax.experimental.pallas import tpu as pltpu


# --------------------------------------------------------------------------- kernel
def _idm_kernel(x_ref, w1_ref, b1_ref, w2_ref, b2_ref, w3_ref, b3_ref,
                logits_ref, feat_ref):
    """fc1 -> ReLU -> fc2 -> ReLU -> classifier, fused over one batch tile."""
    x = x_ref[...]

    # fc1 + ReLU   (Dropout(0.3) -> identity at inference)
    h1 = jnp.dot(x.astype(w1_ref.dtype), w1_ref[...],
                 preferred_element_type=jnp.float32)
    h1 = jnp.maximum(h1 + b1_ref[...], 0.0)          # f32 elementwise (v5e-friendly)

    # fc2 + ReLU   (Dropout(0.3) -> identity at inference)
    h2 = jnp.dot(h1.astype(w2_ref.dtype), w2_ref[...],
                 preferred_element_type=jnp.float32)
    h2 = jnp.maximum(h2 + b2_ref[...], 0.0)
    feat_ref[...] = h2.astype(feat_ref.dtype)         # features output

    # classifier (no activation)
    logits = jnp.dot(h2.astype(w3_ref.dtype), w3_ref[...],
                     preferred_element_type=jnp.float32)
    logits_ref[...] = (logits + b3_ref[...]).astype(logits_ref.dtype)


# --------------------------------------------------------------------------- helpers
def _round_up(x, m):
    return (x + m - 1) // m * m


def _cdiv(a, b):
    return -(-a // b)


@functools.lru_cache(maxsize=1)
def _vmem_capacity_bytes():
    """Per-core VMEM capacity; conservative fallback = 64 MiB (v7x per-TC)."""
    try:
        return int(pltpu.get_tpu_info().vmem_capacity_bytes)
    except Exception:
        return 64 * 2 ** 20


def prepare_params(params, weights_dtype=jnp.bfloat16):
    """One-time weight preparation (pad output dims to 128, cast weights).

    Weights are stored [in, out] (transposed vs. PyTorch) so each layer is x @ W + b.
    Only the *output* feature dims are padded to 128 multiples (lane-dense stores);
    w1 keeps its raw input dim so x never needs wrapper-side padding.  Zero-padded
    columns stay exactly zero through bias-add and ReLU, so padding is numerically
    inert and is sliced off at the end.
    """
    w1, b1, w2, b2, w3, b3 = params
    Din, H2 = w1.shape
    H = w2.shape[1]
    C = w3.shape[1]
    assert w2.shape == (H2, H) and w3.shape == (H, C)
    H2_p, H_p, C_p = (_round_up(d, 128) for d in (H2, H, C))

    def pad2(a, rows, cols):
        a = a.reshape(-1, a.shape[-1]) if a.ndim == 2 else a.reshape(1, -1)
        return jnp.pad(a, ((0, rows - a.shape[0]), (0, cols - a.shape[1])))

    return {
        "w1": pad2(w1, Din, H2_p).astype(weights_dtype),
        "b1": pad2(b1, 1, H2_p).astype(jnp.float32),
        "w2": pad2(w2, H2_p, H_p).astype(weights_dtype),
        "b2": pad2(b2, 1, H_p).astype(jnp.float32),
        "w3": pad2(w3, H_p, C_p).astype(weights_dtype),
        "b3": pad2(b3, 1, C_p).astype(jnp.float32),
        "dims": (Din, H2, H, C, H2_p, H_p, C_p),
    }


@functools.lru_cache(maxsize=None)
def _build_forward(tb, B_p, Din, H2_p, H_p, C_p, out_dtype,
                   single_buffer_weights, vmem_limit):
    """Build (and cache) the pallas_call for a given static configuration."""
    w_kwargs = {}
    if single_buffer_weights and hasattr(pl, "Buffered"):
        # Constant-index blocks: single buffer -> half the VMEM, no buffer swaps.
        w_kwargs = dict(pipeline_mode=pl.Buffered(1))

    def resident(shape):
        return pl.BlockSpec(shape, lambda i: (0, 0), **w_kwargs)

    return pl.pallas_call(
        _idm_kernel,
        out_shape=(jax.ShapeDtypeStruct((B_p, C_p), out_dtype),
                   jax.ShapeDtypeStruct((B_p, H_p), out_dtype)),
        grid_spec=pltpu.PrefetchScalarGridSpec(
            num_scalar_prefetch=0,
            grid=(B_p // tb,),
            in_specs=[
                pl.BlockSpec((tb, Din), lambda i: (i, 0)),     # activation tile
                resident((Din, H2_p)), resident((1, H2_p)),    # fc1
                resident((H2_p, H_p)), resident((1, H_p)),     # fc2
                resident((H_p, C_p)), resident((1, C_p)),      # classifier
            ],
            out_specs=[
                pl.BlockSpec((tb, C_p), lambda i: (i, 0)),     # logits (lane-dense)
                pl.BlockSpec((tb, H_p), lambda i: (i, 0)),     # features (lane-dense)
            ],
        ),
        compiler_params=pltpu.CompilerParams(
            dimension_semantics=("parallel",),                 # megacore / dual-TC
            vmem_limit_bytes=int(vmem_limit)),
    )


def intrusion_detection_forward(x, prepared, *, batch_tile=512, slice_outputs=True):
    """Fused forward. x: [B, input_dim] float32. Returns (logits, features)."""
    Din, H2, H, C, H2_p, H_p, C_p = prepared["dims"]
    B, xd = x.shape
    assert xd == Din, f"input dim mismatch: {xd} vs {Din}"

    # ---- batch tiling ----
    # Small batches: one grid step (never shrink tiles to MXU-starving sizes).
    # Large batches: ~batch_tile rows per step, 256-aligned M tiles (v6e/v7x MXU).
    B_p = _round_up(B, 8)
    if B_p <= batch_tile:
        tb = B_p
    else:
        n_steps = _cdiv(B_p, batch_tile)
        align = 256 if B_p >= 1024 else 8
        tb = _round_up(_cdiv(B_p, n_steps), align)
        B_p = _round_up(B_p, tb)
    xp = jnp.pad(x, ((0, B_p - B), (0, 0))) if B_p != B else x
    # TODO(synk): casting x / features to bf16 would halve HBM traffic on v5e if
    # downstream consumers tolerate it; kept f32 here for exact-match semantics.

    # ---- generation-aware VMEM budget ----
    w_item = jnp.dtype(prepared["w1"].dtype).itemsize
    wbytes = (Din * H2_p + H2_p * H_p + H_p * C_p) * w_item \
        + (H2_p + H_p + C_p) * 4
    tile_bytes = tb * (Din + C_p + H_p) * 4            # input tile + both output tiles
    scratch = tb * (H2_p + 2 * H_p) * 4                # live intermediates (h1, h2)
    est = 2 * wbytes + 2 * tile_bytes + scratch        # conservative: double-buffered
    cap = _vmem_capacity_bytes()
    vmem_limit = min(max(est + (8 << 20), 32 << 20), cap - (16 << 20))
    vmem_limit = max(vmem_limit, 16 << 20)

    args = (xp, prepared["w1"], prepared["b1"], prepared["w2"], prepared["b2"],
            prepared["w3"], prepared["b3"])

    logits_p = feats_p = None
    for single_buf in (True, False):                   # fall back if Buffered(1) is rejected
        call = _build_forward(tb, B_p, Din, H2_p, H_p, C_p,
                              jnp.dtype(x.dtype), single_buf, vmem_limit)
        try:
            logits_p, feats_p = call(*args)
            break
        except Exception:
            if not single_buf:
                raise

    if slice_outputs:
        return logits_p[:B, :C], feats_p[:B, :H]
    return logits_p, feats_p


# --------------------------------------------------------------------------- params / reference
def init_params(key, input_dim, hidden_dim, num_classes):
    """PyTorch nn.Linear-style init: U(-1/sqrt(fan_in), 1/sqrt(fan_in)).

    Weights are stored [in, out] (transposed vs. PyTorch) so each layer is x @ W + b.
    """
    dims = [(input_dim, 2 * hidden_dim),
            (2 * hidden_dim, hidden_dim),
            (hidden_dim, num_classes)]
    params = []
    for fan_in, fan_out in dims:
        key, kw, kb = jax.random.split(key, 3)
        bound = 1.0 / (fan_in ** 0.5)
        w = jax.random.uniform(kw, (fan_in, fan_out), jnp.float32, -bound, bound)
        b = jax.random.uniform(kb, (1, fan_out), jnp.float32, -bound, bound)
        params += [w, b]
    return tuple(params)


def reference_forward(x, params):
    """Pure-JAX f32 reference (inference: dropout = identity)."""
    w1, b1, w2, b2, w3, b3 = params
    h1 = jnp.maximum(x @ w1 + b1, 0.0)
    feats = jnp.maximum(h1 @ w2 + b2, 0.0)
    logits = feats @ w3 + b3
    return logits, feats


# --------------------------------------------------------------------------- demo / self-check
if __name__ == "__main__":
    input_dim, hidden_dim, num_classes = 32, 32, 10
    batch = 16

    key = jax.random.PRNGKey(0)
    key_p, key_x = jax.random.split(key)
    params = init_params(key_p, input_dim, hidden_dim, num_classes)
    x = jax.random.normal(key_x, (batch, input_dim), jnp.float32)

    ref_logits, ref_feats = reference_forward(x, params)

    # f32-weight path: strict check against the pure-JAX reference.
    prepared_f32 = prepare_params(params, weights_dtype=jnp.float32)
    logits32, feats32 = intrusion_detection_forward(x, prepared_f32)
    jax.block_until_ready((logits32, feats32))
    assert logits32.shape == (batch, num_classes)
    assert feats32.shape == (batch, hidden_dim)
    assert jnp.allclose(logits32, ref_logits, atol=1e-4, rtol=1e-4), "f32 logits mismatch"
    assert jnp.allclose(feats32, ref_feats, atol=1e-4, rtol=1e-4), "f32 features mismatch"

    # bf16-weight path (default; MXU-rate on v6e/v7x): slightly looser tolerance.
    prepared_bf16 = prepare_params(params, weights_dtype=jnp.bfloat16)
    logits, feats = intrusion_detection_forward(x, prepared_bf16)
    logits, feats = jax.block_until_ready((logits, feats))
    assert logits.shape == (batch, num_classes)
    assert feats.shape == (batch, hidden_dim)
    assert jnp.allclose(logits, ref_logits, atol=3e-2, rtol=3e-2), "bf16 logits mismatch"
    assert jnp.allclose(feats, ref_feats, atol=3e-2, rtol=3e-2), "bf16 features mismatch"

    print("KERNEL_OK")
</pallas_src>

<mosaic_0001>
module attributes {stable_mosaic.version = 11 : i64} {
  func.func @_idm_kernel(%arg0: i32, %arg1: memref<16x32xf32, #tpu.memory_space<vmem>>, %arg2: memref<32x128xf32, #tpu.memory_space<vmem>>, %arg3: memref<1x128xf32, #tpu.memory_space<vmem>>, %arg4: memref<128x128xf32, #tpu.memory_space<vmem>>, %arg5: memref<1x128xf32, #tpu.memory_space<vmem>>, %arg6: memref<128x128xf32, #tpu.memory_space<vmem>>, %arg7: memref<1x128xf32, #tpu.memory_space<vmem>>, %arg8: memref<16x128xf32, #tpu.memory_space<vmem>>, %arg9: memref<16x128xf32, #tpu.memory_space<vmem>>) attributes {dimension_semantics = [#tpu.dimension_semantics<parallel>], iteration_bounds = array<i64: 1>, scalar_prefetch = 0 : i64, scratch_operands = 0 : i64, tpu.core_type = #tpu.core_type<tc>, window_params = [{transform_indices = @transform_0, window_bounds = array<i64: 16, 32>}, {pipeline_mode = #tpu.pipeline_mode<synchronous>, transform_indices = @transform_1, window_bounds = array<i64: 32, 128>}, {pipeline_mode = #tpu.pipeline_mode<synchronous>, transform_indices = @transform_2, window_bounds = array<i64: 1, 128>}, {pipeline_mode = #tpu.pipeline_mode<synchronous>, transform_indices = @transform_3, window_bounds = array<i64: 128, 128>}, {pipeline_mode = #tpu.pipeline_mode<synchronous>, transform_indices = @transform_4, window_bounds = array<i64: 1, 128>}, {pipeline_mode = #tpu.pipeline_mode<synchronous>, transform_indices = @transform_5, window_bounds = array<i64: 128, 128>}, {pipeline_mode = #tpu.pipeline_mode<synchronous>, transform_indices = @transform_6, window_bounds = array<i64: 1, 128>}, {transform_indices = @transform_7, window_bounds = array<i64: 16, 128>}, {transform_indices = @transform_8, window_bounds = array<i64: 16, 128>}]} {
    %c0 = arith.constant 0 : index
    %c0_0 = arith.constant 0 : index
    %0 = vector.load %arg1[%c0, %c0_0] : memref<16x32xf32, #tpu.memory_space<vmem>>, vector<16x32xf32>
    %c0_1 = arith.constant 0 : index
    %c0_2 = arith.constant 0 : index
    %1 = vector.load %arg2[%c0_1, %c0_2] : memref<32x128xf32, #tpu.memory_space<vmem>>, vector<32x128xf32>
    %cst = arith.constant dense<0.000000e+00> : vector<16x128xf32>
    %2 = tpu.matmul %0, %1, %cst {dimension_numbers = #tpu.dot_dimension_numbers<[1], [0], [0], [1], [0, 0, 1, 1], [], []>} : vector<16x32xf32>, vector<32x128xf32>, vector<16x128xf32> -> vector<16x128xf32>
    %c0_3 = arith.constant 0 : index
    %c0_4 = arith.constant 0 : index
    %3 = vector.load %arg3[%c0_3, %c0_4] : memref<1x128xf32, #tpu.memory_space<vmem>>, vector<1x128xf32>
    %4 = vector.broadcast %3 : vector<1x128xf32> to vector<16x128xf32>
    %5 = arith.addf %2, %4 : vector<16x128xf32>
    %cst_5 = arith.constant 0.000000e+00 : f32
    %6 = vector.broadcast %cst_5 : f32 to vector<16x128xf32>
    %7 = arith.maximumf %5, %6 : vector<16x128xf32>
    %c0_6 = arith.constant 0 : index
    %c0_7 = arith.constant 0 : index
    %8 = vector.load %arg4[%c0_6, %c0_7] : memref<128x128xf32, #tpu.memory_space<vmem>>, vector<128x128xf32>
    %cst_8 = arith.constant dense<0.000000e+00> : vector<16x128xf32>
    %9 = tpu.matmul %7, %8, %cst_8 {dimension_numbers = #tpu.dot_dimension_numbers<[1], [0], [0], [1], [0, 0, 1, 1], [], []>} : vector<16x128xf32>, vector<128x128xf32>, vector<16x128xf32> -> vector<16x128xf32>
    %c0_9 = arith.constant 0 : index
    %c0_10 = arith.constant 0 : index
    %10 = vector.load %arg5[%c0_9, %c0_10] : memref<1x128xf32, #tpu.memory_space<vmem>>, vector<1x128xf32>
    %11 = vector.broadcast %10 : vector<1x128xf32> to vector<16x128xf32>
    %12 = arith.addf %9, %11 : vector<16x128xf32>
    %cst_11 = arith.constant 0.000000e+00 : f32
    %13 = vector.broadcast %cst_11 : f32 to vector<16x128xf32>
    %14 = arith.maximumf %12, %13 : vector<16x128xf32>
    %c0_12 = arith.constant 0 : index
    %c0_13 = arith.constant 0 : index
    %15 = vector.load %arg9[%c0_12, %c0_13] : memref<16x128xf32, #tpu.memory_space<vmem>>, vector<16x128xf32>
    tpu.vector_store %arg9[%c0_12, %c0_13], %14 {strides = array<i32>} : memref<16x128xf32, #tpu.memory_space<vmem>>, vector<16x128xf32>,
    %c0_14 = arith.constant 0 : index
    %c0_15 = arith.constant 0 : index
    %16 = vector.load %arg6[%c0_14, %c0_15] : memref<128x128xf32, #tpu.memory_space<vmem>>, vector<128x128xf32>
    %cst_16 = arith.constant dense<0.000000e+00> : vector<16x128xf32>
    %17 = tpu.matmul %14, %16, %cst_16 {dimension_numbers = #tpu.dot_dimension_numbers<[1], [0], [0], [1], [0, 0, 1, 1], [], []>} : vector<16x128xf32>, vector<128x128xf32>, vector<16x128xf32> -> vector<16x128xf32>
    %c0_17 = arith.constant 0 : index
    %c0_18 = arith.constant 0 : index
    %18 = vector.load %arg7[%c0_17, %c0_18] : memref<1x128xf32, #tpu.memory_space<vmem>>, vector<1x128xf32>
    %19 = vector.broadcast %18 : vector<1x128xf32> to vector<16x128xf32>
    %20 = arith.addf %17, %19 : vector<16x128xf32>
    %c0_19 = arith.constant 0 : index
    %c0_20 = arith.constant 0 : index
    %21 = vector.load %arg8[%c0_19, %c0_20] : memref<16x128xf32, #tpu.memory_space<vmem>>, vector<16x128xf32>
    tpu.vector_store %arg8[%c0_19, %c0_20], %20 {strides = array<i32>} : memref<16x128xf32, #tpu.memory_space<vmem>>, vector<16x128xf32>,
    return
  }
  func.func @transform_0(%arg0: i32) -> (i32, i32) {
    %c0_i32 = arith.constant 0 : i32
    %c0_i32_0 = arith.constant 0 : i32
    return %arg0, %c0_i32 : i32, i32
  }
  func.func @transform_1(%arg0: i32) -> (i32, i32) {
    %c0_i32 = arith.constant 0 : i32
    %c0_i32_0 = arith.constant 0 : i32
    %c0_i32_1 = arith.constant 0 : i32
    return %c0_i32, %c0_i32_0 : i32, i32
  }
  func.func @transform_2(%arg0: i32) -> (i32, i32) {
    %c0_i32 = arith.constant 0 : i32
    %c0_i32_0 = arith.constant 0 : i32
    %c0_i32_1 = arith.constant 0 : i32
    return %c0_i32, %c0_i32_0 : i32, i32
  }
  func.func @transform_3(%arg0: i32) -> (i32, i32) {
    %c0_i32 = arith.constant 0 : i32
    %c0_i32_0 = arith.constant 0 : i32
    %c0_i32_1 = arith.constant 0 : i32
    return %c0_i32, %c0_i32_0 : i32, i32
  }
  func.func @transform_4(%arg0: i32) -> (i32, i32) {
    %c0_i32 = arith.constant 0 : i32
    %c0_i32_0 = arith.constant 0 : i32
    %c0_i32_1 = arith.constant 0 : i32
    return %c0_i32, %c0_i32_0 : i32, i32
  }
  func.func @transform_5(%arg0: i32) -> (i32, i32) {
    %c0_i32 = arith.constant 0 : i32
    %c0_i32_0 = arith.constant 0 : i32
    %c0_i32_1 = arith.constant 0 : i32
    return %c0_i32, %c0_i32_0 : i32, i32
  }
  func.func @transform_6(%arg0: i32) -> (i32, i32) {
    %c0_i32 = arith.constant 0 : i32
    %c0_i32_0 = arith.constant 0 : i32
    %c0_i32_1 = arith.constant 0 : i32
    return %c0_i32, %c0_i32_0 : i32, i32
  }
  func.func @transform_7(%arg0: i32) -> (i32, i32) {
    %c0_i32 = arith.constant 0 : i32
    %c0_i32_0 = arith.constant 0 : i32
    return %arg0, %c0_i32 : i32, i32
  }
  func.func @transform_8(%arg0: i32) -> (i32, i32) {
    %c0_i32 = arith.constant 0 : i32
    %c0_i32_0 = arith.constant 0 : i32
    return %arg0, %c0_i32 : i32, i32
  }
}

module attributes {stable_mosaic.version = 11 : i64} {
  func.func @_idm_kernel(%arg0: i32, %arg1: memref<16x32xf32, #tpu.memory_space<vmem>>, %arg2: memref<32x128xf32, #tpu.memory_space<vmem>>, %arg3: memref<1x128xf32, #tpu.memory_space<vmem>>, %arg4: memref<128x128xf32, #tpu.memory_space<vmem>>, %arg5: memref<1x128xf32, #tpu.memory_space<vmem>>, %arg6: memref<128x128xf32, #tpu.memory_space<vmem>>, %arg7: memref<1x128xf32, #tpu.memory_space<vmem>>, %arg8: memref<16x128xf32, #tpu.memory_space<vmem>>, %arg9: memref<16x128xf32, #tpu.memory_space<vmem>>) attributes {dimension_semantics = [#tpu.dimension_semantics<parallel>], iteration_bounds = array<i64: 1>, scalar_prefetch = 0 : i64, scratch_operands = 0 : i64, tpu.core_type = #tpu.core_type<tc>, window_params = [{transform_indices = @transform_0, window_bounds = array<i64: 16, 32>}, {pipeline_mode = #tpu.pipeline_mode<synchronous>, transform_indices = @transform_1, window_bounds = array<i64: 32, 128>}, {pipeline_mode = #tpu.pipeline_mode<synchronous>, transform_indices = @transform_2, window_bounds = array<i64: 1, 128>}, {pipeline_mode = #tpu.pipeline_mode<synchronous>, transform_indices = @transform_3, window_bounds = array<i64: 128, 128>}, {pipeline_mode = #tpu.pipeline_mode<synchronous>, transform_indices = @transform_4, window_bounds = array<i64: 1, 128>}, {pipeline_mode = #tpu.pipeline_mode<synchronous>, transform_indices = @transform_5, window_bounds = array<i64: 128, 128>}, {pipeline_mode = #tpu.pipeline_mode<synchronous>, transform_indices = @transform_6, window_bounds = array<i64: 1, 128>}, {transform_indices = @transform_7, window_bounds = array<i64: 16, 128>}, {transform_indices = @transform_8, window_bounds = array<i64: 16, 128>}]} {
    %c0 = arith.constant 0 : index
    %c0_0 = arith.constant 0 : index
    %0 = vector.load %arg1[%c0, %c0_0] : memref<16x32xf32, #tpu.memory_space<vmem>>, vector<16x32xf32>
    %c0_1 = arith.constant 0 : index
    %c0_2 = arith.constant 0 : index
    %1 = vector.load %arg2[%c0_1, %c0_2] : memref<32x128xf32, #tpu.memory_space<vmem>>, vector<32x128xf32>
    %cst = arith.constant dense<0.000000e+00> : vector<16x128xf32>
    %2 = tpu.matmul %0, %1, %cst {dimension_numbers = #tpu.dot_dimension_numbers<[1], [0], [0], [1], [0, 0, 1, 1], [], []>} : vector<16x32xf32>, vector<32x128xf32>, vector<16x128xf32> -> vector<16x128xf32>
    %c0_3 = arith.constant 0 : index
    %c0_4 = arith.constant 0 : index
    %3 = vector.load %arg3[%c0_3, %c0_4] : memref<1x128xf32, #tpu.memory_space<vmem>>, vector<1x128xf32>
    %4 = vector.broadcast %3 : vector<1x128xf32> to vector<16x128xf32>
    %5 = arith.addf %2, %4 : vector<16x128xf32>
    %cst_5 = arith.constant 0.000000e+00 : f32
    %6 = vector.broadcast %cst_5 : f32 to vector<16x128xf32>
    %7 = arith.maximumf %5, %6 : vector<16x128xf32>
    %c0_6 = arith.constant 0 : index
    %c0_7 = arith.constant 0 : index
    %8 = vector.load %arg4[%c0_6, %c0_7] : memref<128x128xf32, #tpu.memory_space<vmem>>, vector<128x128xf32>
    %cst_8 = arith.constant dense<0.000000e+00> : vector<16x128xf32>
    %9 = tpu.matmul %7, %8, %cst_8 {dimension_numbers = #tpu.dot_dimension_numbers<[1], [0], [0], [1], [0, 0, 1, 1], [], []>} : vector<16x128xf32>, vector<128x128xf32>, vector<16x128xf32> -> vector<16x128xf32>
    %c0_9 = arith.constant 0 : index
    %c0_10 = arith.constant 0 : index
    %10 = vector.load %arg5[%c0_9, %c0_10] : memref<1x128xf32, #tpu.memory_space<vmem>>, vector<1x128xf32>
    %11 = vector.broadcast %10 : vector<1x128xf32> to vector<16x128xf32>
    %12 = arith.addf %9, %11 : vector<16x128xf32>
    %cst_11 = arith.constant 0.000000e+00 : f32
    %13 = vector.broadcast %cst_11 : f32 to vector<16x128xf32>
    %14 = arith.maximumf %12, %13 : vector<16x128xf32>
    %c0_12 = arith.constant 0 : index
    %c0_13 = arith.constant 0 : index
    %15 = vector.load %arg9[%c0_12, %c0_13] : memref<16x128xf32, #tpu.memory_space<vmem>>, vector<16x128xf32>
    tpu.vector_store %arg9[%c0_12, %c0_13], %14 {strides = array<i32>} : memref<16x128xf32, #tpu.memory_space<vmem>>, vector<16x128xf32>,
    %c0_14 = arith.constant 0 : index
    %c0_15 = arith.constant 0 : index
    %16 = vector.load %arg6[%c0_14, %c0_15] : memref<128x128xf32, #tpu.memory_space<vmem>>, vector<128x128xf32>
    %cst_16 = arith.constant dense<0.000000e+00> : vector<16x128xf32>
    %17 = tpu.matmul %14, %16, %cst_16 {dimension_numbers = #tpu.dot_dimension_numbers<[1], [0], [0], [1], [0, 0, 1, 1], [], []>} : vector<16x128xf32>, vector<128x128xf32>, vector<16x128xf32> -> vector<16x128xf32>
    %c0_17 = arith.constant 0 : index
    %c0_18 = arith.constant 0 : index
    %18 = vector.load %arg7[%c0_17, %c0_18] : memref<1x128xf32, #tpu.memory_space<vmem>>, vector<1x128xf32>
    %19 = vector.broadcast %18 : vector<1x128xf32> to vector<16x128xf32>
    %20 = arith.addf %17, %19 : vector<16x128xf32>
    %c0_19 = arith.constant 0 : index
    %c0_20 = arith.constant 0 : index
    %21 = vector.load %arg8[%c0_19, %c0_20] : memref<16x128xf32, #tpu.memory_space<vmem>>, vector<16x128xf32>
    tpu.vector_store %arg8[%c0_19, %c0_20], %20 {strides = array<i32>} : memref<16x128xf32, #tpu.memory_space<vmem>>, vector<16x128xf32>,
    return
  }
  func.func @transform_0(%arg0: i32) -> (i32, i32) {
    %c0_i32 = arith.constant 0 : i32
    %c0_i32_0 = arith.constant 0 : i32
    return %arg0, %c0_i32 : i32, i32
  }
  func.func @transform_1(%arg0: i32) -> (i32, i32) {
    %c0_i32 = arith.constant 0 : i32
    %c0_i32_0 = arith.constant 0 : i32
    %c0_i32_1 = arith.constant 0 : i32
    return %c0_i32, %c0_i32_0 : i32, i32
  }
  func.func @transform_2(%arg0: i32) -> (i32, i32) {
    %c0_i32 = arith.constant 0 : i32
    %c0_i32_0 = arith.constant 0 : i32
    %c0_i32_1 = arith.constant 0 : i32
    return %c0_i32, %c0_i32_0 : i32, i32
  }
  func.func @transform_3(%arg0: i32) -> (i32, i32) {
    %c0_i32 = arith.constant 0 : i32
    %c0_i32_0 = arith.constant 0 : i32
    %c0_i32_1 = arith.constant 0 : i32
    return %c0_i32, %c0_i32_0 : i32, i32
  }
  func.func @transform_4(%arg0: i32) -> (i32, i32) {
    %c0_i32 = arith.constant 0 : i32
    %c0_i32_0 = arith.constant 0 : i32
    %c0_i32_1 = arith.constant 0 : i32
    return %c0_i32, %c0_i32_0 : i32, i32
  }
  func.func @transform_5(%arg0: i32) -> (i32, i32) {
    %c0_i32 = arith.constant 0 : i32
    %c0_i32_0 = arith.constant 0 : i32
    %c0_i32_1 = arith.constant 0 : i32
    return %c0_i32, %c0_i32_0 : i32, i32
  }
  func.func @transform_6(%arg0: i32) -> (i32, i32) {
    %c0_i32 = arith.constant 0 : i32
    %c0_i32_0 = arith.constant 0 : i32
    %c0_i32_1 = arith.constant 0 : i32
    return %c0_i32, %c0_i32_0 : i32, i32
  }
  func.func @transform_7(%arg0: i32) -> (i32, i32) {
    %c0_i32 = arith.constant 0 : i32
    %c0_i32_0 = arith.constant 0 : i32
    return %arg0, %c0_i32 : i32, i32
  }
  func.func @transform_8(%arg0: i32) -> (i32, i32) {
    %c0_i32 = arith.constant 0 : i32
    %c0_i32_0 = arith.constant 0 : i32
    return %arg0, %c0_i32 : i32, i32
  }
}

</mosaic_0001>

<llo_original>
// kernel: tpu_custom_call.1
$region0: #{tpu_custom_call.1}
  #allocation0 [shape = 'u32[]', space=smem, size = 0x4, offset = 0x4, fixed_abs, tag = 'smem constant byte address 0x4 - core index']
  #allocation1 [shape = 'u32[144,128]{1,0:T(1,128)}', space=vmem, size = 0x12000, scoped, tag = 'internal scratch']
  %s0 = inlined_call_operand.hbm [shape: f32[16,32], index: 0, kind: input, shape index: {}]
  %s1 = inlined_call_operand.hbm [shape: f32[32,128], index: 1, kind: input, shape index: {}]
  %s2 = inlined_call_operand.vmem [shape: f32[1,128], index: 2, kind: input, shape index: {}]
  %s3 = inlined_call_operand.hbm [shape: f32[128,128], index: 3, kind: input, shape index: {}]
  %s4 = inlined_call_operand.vmem [shape: f32[1,128], index: 4, kind: input, shape index: {}]
  %s5 = inlined_call_operand.hbm [shape: f32[128,128], index: 5, kind: input, shape index: {}]
  %s6 = inlined_call_operand.vmem [shape: f32[1,128], index: 6, kind: input, shape index: {}]
  %s7 = inlined_call_operand.hbm [shape: f32[16,128], index: 7, kind: output, shape index: {0}]
  %s8 = inlined_call_operand.hbm [shape: f32[16,128], index: 8, kind: output, shape index: {1}]
  %9 = xla_tuple %s7, %s8
  %s10 = sld [smem:[#allocation0]]
  $region62: #{tpu_custom_call.1} parent=0
    _
  %s12 = ssub.s32 1, %s10
  %s13 = scalar_select 0, %s12, %s10
  $region1: #{tpu_custom_call.1} parent=0
    #allocation2 [shape = 'u8[8192]{0}', space=vmem, size = 0x2000, scoped, tag = 'input window, operand 0, single buffered']
    #allocation3 [shape = 's32[1]{0}', space=sflag, size = 0x4, scoped, tag = 'scoped memory for tpu_custom_call.1']
    #allocation4 [shape = 's32[1]{0}', space=sflag, size = 0x4, scoped, tag = 'scoped memory for tpu_custom_call.1']
    #allocation5 [shape = 'u8[16384]{0}', space=vmem, size = 0x4000, scoped, tag = 'input window, operand 1, single buffered']
    #allocation6 [shape = 's32[1]{0}', space=sflag, size = 0x4, scoped, tag = 'scoped memory for tpu_custom_call.1']
    #allocation7 [shape = 'u8[65536]{0}', space=vmem, size = 0x10000, scoped, tag = 'input window, operand 3, single buffered']
    #allocation8 [shape = 'u8[65536]{0}', space=vmem, size = 0x10000, scoped, tag = 'input window, operand 5, single buffered']
    #allocation9 [shape = 's32[1]{0}', space=sflag, size = 0x4, scoped, tag = 'scoped memory for tpu_custom_call.1']
    #allocation10 [shape = 'u8[8192]{0}', space=vmem, size = 0x2000, scoped, tag = 'output window, operand 0, single buffered']
    #allocation11 [shape = 'u8[8192]{0}', space=vmem, size = 0x2000, scoped, tag = 'output window, operand 1, single buffered']
    #allocation12 [shape = 's32[1]{0}', space=sflag, size = 0x4, scoped, tag = 'scoped memory for tpu_custom_call.1']
    %14 = vsyncpa [#allocation3], 0
    %15 = vsyncpa [#allocation6], 0
    %16 = vsyncpa [#allocation9], 0
    %17 = vsyncpa [#allocation4], 0
    %18 = vsyncpa [#allocation12], 0
    // Predicated region
    $region2: #{tpu_custom_call.1} parent=1 // pred_check
      _
    $region3: #{tpu_custom_call.1} parent=1 // pred_check_branch
      %20 = sbr.rel (0) target = $region5
    $region4: #{tpu_custom_call.1} parent=1 // pred_region
      %s22 = ssub.s32 256, 256
      %23 = vsyncadd [#allocation3], %s22
      %s24 = sshll.u32 [#allocation2], 4
      %s25 = int_to_ptr.vmem [resolvable:$true] %s24
      %30 = dma.hbm_to_vmem [thread:$0]  %s0, 256, %s25, [#allocation3], 128, 128, 8
    $region5: #{tpu_custom_call.1} parent=1 // pred_fallthru
      _
    // Predicated region
    $region6: #{tpu_custom_call.1} parent=1 // pred_check
      _
    $region7: #{tpu_custom_call.1} parent=1 // pred_check_branch
      %32 = sbr.rel (0) target = $region9
    $region8: #{tpu_custom_call.1} parent=1 // pred_region
      %s34 = ssub.s32 512, 512
      %35 = vsyncadd [#allocation6], %s34
      %s36 = sshll.u32 [#allocation5], 4
      %s37 = int_to_ptr.vmem [resolvable:$true] %s36
      %42 = dma.hbm_to_vmem [thread:$0]  %s1, 512, %s37, [#allocation6], 128, 128, 8
    $region9: #{tpu_custom_call.1} parent=1 // pred_fallthru
      _
    // Predicated region
    $region10: #{tpu_custom_call.1} parent=1 // pred_check
      _
    $region11: #{tpu_custom_call.1} parent=1 // pred_check_branch
      %44 = sbr.rel (0) target = $region13
    $region12: #{tpu_custom_call.1} parent=1 // pred_region
      _
    $region13: #{tpu_custom_call.1} parent=1 // pred_fallthru
      _
    // Predicated region
    $region14: #{tpu_custom_call.1} parent=1 // pred_check
      _
    $region15: #{tpu_custom_call.1} parent=1 // pred_check_branch
      %46 = sbr.rel (0) target = $region17
    $region16: #{tpu_custom_call.1} parent=1 // pred_region
      %s48 = ssub.s32 2048, 2048
      %49 = vsyncadd [#allocation6], %s48
      %s50 = sshll.u32 [#allocation7], 4
      %s51 = int_to_ptr.vmem [resolvable:$true] %s50
      %56 = dma.hbm_to_vmem [thread:$0]  %s3, 2048, %s51, [#allocation6], 128, 128, 8
    $region17: #{tpu_custom_call.1} parent=1 // pred_fallthru
      _
    // Predicated region
    $region18: #{tpu_custom_call.1} parent=1 // pred_check
      _
    $region19: #{tpu_custom_call.1} parent=1 // pred_check_branch
      %58 = sbr.rel (0) target = $region21
    $region20: #{tpu_custom_call.1} parent=1 // pred_region
      _
    $region21: #{tpu_custom_call.1} parent=1 // pred_fallthru
      _
    // Predicated region
    $region22: #{tpu_custom_call.1} parent=1 // pred_check
      _
    $region23: #{tpu_custom_call.1} parent=1 // pred_check_branch
      %60 = sbr.rel (0) target = $region25
    $region24: #{tpu_custom_call.1} parent=1 // pred_region
      %s62 = ssub.s32 2048, 2048
      %63 = vsyncadd [#allocation9], %s62
      %s64 = sshll.u32 [#allocation8], 4
      %s65 = int_to_ptr.vmem [resolvable:$true] %s64
      %70 = dma.hbm_to_vmem [thread:$0]  %s5, 2048, %s65, [#allocation9], 128, 128, 8
    $region25: #{tpu_custom_call.1} parent=1 // pred_fallthru
      _
    // Predicated region
    $region26: #{tpu_custom_call.1} parent=1 // pred_check
      _
    $region27: #{tpu_custom_call.1} parent=1 // pred_check_branch
      %72 = sbr.rel (0) target = $region29
    $region28: #{tpu_custom_call.1} parent=1 // pred_region
      _
    $region29: #{tpu_custom_call.1} parent=1 // pred_fallthru
      _
    // Predicated region
    $region30: #{tpu_custom_call.1} parent=1 // pred_check
      _
    $region31: #{tpu_custom_call.1} parent=1 // pred_check_branch
      %74 = sbr.rel (0) target = $region33
    $region32: #{tpu_custom_call.1} parent=1 // pred_region
      %75 = dma.done [#allocation3], 256
    $region33: #{tpu_custom_call.1} parent=1 // pred_fallthru
      _
    // Predicated region
    $region34: #{tpu_custom_call.1} parent=1 // pred_check
      _
    $region35: #{tpu_custom_call.1} parent=1 // pred_check_branch
      %77 = sbr.rel (0) target = $region37
    $region36: #{tpu_custom_call.1} parent=1 // pred_region
      %78 = dma.done [#allocation6], 512
    $region37: #{tpu_custom_call.1} parent=1 // pred_fallthru
      _
    // Predicated region
    $region38: #{tpu_custom_call.1} parent=1 // pred_check
      _
    $region39: #{tpu_custom_call.1} parent=1 // pred_check_branch
      %80 = sbr.rel (0) target = $region41
    $region40: #{tpu_custom_call.1} parent=1 // pred_region
      %81 = dma.done [#allocation6], 2048
    $region41: #{tpu_custom_call.1} parent=1 // pred_fallthru
      _
    // Predicated region
    $region42: #{tpu_custom_call.1} parent=1 // pred_check
      _
    $region43: #{tpu_custom_call.1} parent=1 // pred_check_branch
      %83 = sbr.rel (0) target = $region45
    $region44: #{tpu_custom_call.1} parent=1 // pred_region
      %84 = dma.done [#allocation9], 2048
    $region45: #{tpu_custom_call.1} parent=1 // pred_fallthru
      _
    %v85 = vld [vmem:[#allocation2] sm:$0xff]
    %v86 = vld [vmem:[#allocation2 + $0x8] sm:$0xff]
    %v87 = vld [vmem:[#allocation5] sm:$0xff]
    %v88 = vld [vmem:[#allocation5 + $0x8] sm:$0xff]
    %v89 = vld [vmem:[#allocation5 + $0x10] sm:$0xff]
    %v90 = vld [vmem:[#allocation5 + $0x18] sm:$0xff]
    %v91 = vld [vmem:[%s2] sm:$0x1]
    %v93 = vlaneseq
    %v94 = vshrl.u32 %v93, 7
    %v95 = vsub.s32 0, %v94
    %v96 = vrot.slane %v91, %v95
    %vm98 = vcmask 261120
    %v100 = vsel %vm98, %v85, 0
    %v103 = vsel %vm98, %v86, 0
    %105 = vmatprep.subr.mxu0 0.0
    %106 = vmatpush1.msra.mxu0 %v87
    %107 = vmatprep.subr.mxu0 0.0
    %108 = vmatpush1.msra.mxu0 %v88
    %109 = vmatprep.subr.mxu0 0.0
    %110 = vmatpush1.msra.mxu0 %v89
    %111 = vmatprep.subr.mxu0 0.0
    %112 = vmatpush1.msra.mxu0 %v90
    %113 = vmatprep.subr.mxu0 0.0
    %114 = vmatpush1.msra.mxu0 0.0
    %115 = vmatprep.subr.mxu0 0.0
    %116 = vmatpush1.msra.mxu0 0.0
    %117 = vmatprep.subr.mxu0 0.0
    %118 = vmatpush1.msra.mxu0 0.0
    %119 = vmatprep.subr.mxu0 0.0
    %120 = vmatpush1.msra.mxu0 0.0
    %121 = vmatprep.subr.mxu0 0.0
    %122 = vmatpush1.msra.mxu0 0.0
    %123 = vmatprep.subr.mxu0 0.0
    %124 = vmatpush1.msra.mxu0 0.0
    %125 = vmatprep.subr.mxu0 0.0
    %126 = vmatpush1.msra.mxu0 0.0
    %127 = vmatprep.subr.mxu0 0.0
    %128 = vmatpush1.msra.mxu0 0.0
    %129 = vmatprep.subr.mxu0 0.0
    %130 = vmatpush1.msra.mxu0 0.0
    %131 = vmatprep.subr.mxu0 0.0
    %132 = vmatpush1.msra.mxu0 0.0
    %133 = vmatprep.subr.mxu0 0.0
    %134 = vmatpush1.msra.mxu0 0.0
    %135 = vmatprep.subr.mxu0 0.0
    %136 = vmatpush1.msra.mxu0 0.0
    %137 = vmatprep.subr.mxu0 0.0
    %138 = vmatpush1.msra.mxu0 0.0
    %139 = vmatprep.subr.mxu0 0.0
    %140 = vmatpush1.msra.mxu0 0.0
    %141 = vmatprep.subr.mxu0 0.0
    %142 = vmatpush1.msra.mxu0 0.0
    %143 = vmatprep.subr.mxu0 0.0
    %144 = vmatpush1.msra.mxu0 0.0
    %145 = vmatprep.subr.mxu0 0.0
    %146 = vmatpush1.msra.mxu0 0.0
    %147 = vmatprep.subr.mxu0 0.0
    %148 = vmatpush1.msra.mxu0 0.0
    %149 = vmatprep.subr.mxu0 0.0
    %150 = vmatpush1.msra.mxu0 0.0
    %151 = vmatprep.subr.mxu0 0.0
    %152 = vmatpush1.msra.mxu0 0.0
    %153 = vmatprep.subr.mxu0 0.0
    %154 = vmatpush1.msra.mxu0 0.0
    %155 = vmatprep.subr.mxu0 0.0
    %156 = vmatpush1.msra.mxu0 0.0
    %157 = vmatprep.subr.mxu0 0.0
    %158 = vmatpush1.msra.mxu0 0.0
    %159 = vmatprep.subr.mxu0 0.0
    %160 = vmatpush1.msra.mxu0 0.0
    %161 = vmatprep.subr.mxu0 0.0
    %162 = vmatpush1.msra.mxu0 0.0
    %163 = vmatprep.subr.mxu0 0.0
    %164 = vmatpush1.msra.mxu0 0.0
    %165 = vmatprep.subr.mxu0 0.0
    %166 = vmatpush1.msra.mxu0 0.0
    %167 = vmatprep.subr.mxu0 0.0
    %168 = vmatpush1.msra.mxu0 0.0
    %169 = vmatprep.mubr.f32.mxu0 0.0
    %170 = vmatmul.mubr.f32.gmra.mrb[0].mxu0 %v100
    %v171 = vpop.f32.mrb[0].mxu0
    %v172 = vadd.f32 %v96, %v171
    %v173 = vpop.f32.mrb[0].mxu0
    %174 = vmatprep.mubr.f32.mxu0 0.0
    %175 = vmatmul.mubr.f32.gmra.mrb[0].mxu0 %v103
    %v176 = vpop.f32.mrb[0].mxu0
    %v177 = vadd.f32 %v96, %v176
    %v178 = vpop.f32.mrb[0].mxu0
    %179 = vdwg.mxu0
    %v180 = vmax.f32 %v172, 0.0
    %v181 = vmax.f32 %v177, 0.0
    %v182 = vld [vmem:[#allocation7] sm:$0xff]
    %v183 = vld [vmem:[#allocation7 + $0x8] sm:$0xff]
    %v184 = vld [vmem:[#allocation7 + $0x10] sm:$0xff]
    %v185 = vld [vmem:[#allocation7 + $0x18] sm:$0xff]
    %v186 = vld [vmem:[#allocation7 + $0x20] sm:$0xff]
    %v187 = vld [vmem:[#allocation7 + $0x28] sm:$0xff]
    %v188 = vld [vmem:[#allocation7 + $0x30] sm:$0xff]
    %v189 = vld [vmem:[#allocation7 + $0x38] sm:$0xff]
    %v190 = vld [vmem:[#allocation7 + $0x40] sm:$0xff]
    %v191 = vld [vmem:[#allocation7 + $0x48] sm:$0xff]
    %v192 = vld [vmem:[#allocation7 + $0x50] sm:$0xff]
    %v193 = vld [vmem:[#allocation7 + $0x58] sm:$0xff]
    %v194 = vld [vmem:[#allocation7 + $0x60] sm:$0xff]
    %v195 = vld [vmem:[#allocation7 + $0x68] sm:$0xff]
    %v196 = vld [vmem:[#allocation7 + $0x70] sm:$0xff]
    %v197 = vld [vmem:[#allocation7 + $0x78] sm:$0xff]
    %v198 = vld [vmem:[%s4] sm:$0x1]
    %v200 = vlaneseq
    %v201 = vshrl.u32 %v200, 7
    %v202 = vsub.s32 0, %v201
    %v203 = vrot.slane %v198, %v202
    %205 = vmatprep.subr.mxu0 0.0
    %206 = vmatpush1.msra.mxu0 %v182
    %207 = vmatprep.subr.mxu0 0.0
    %208 = vmatpush1.msra.mxu0 %v183
    %209 = vmatprep.subr.mxu0 0.0
    %210 = vmatpush1.msra.mxu0 %v184
    %211 = vmatprep.subr.mxu0 0.0
    %212 = vmatpush1.msra.mxu0 %v185
    %213 = vmatprep.subr.mxu0 0.0
    %214 = vmatpush1.msra.mxu0 %v186
    %215 = vmatprep.subr.mxu0 0.0
    %216 = vmatpush1.msra.mxu0 %v187
    %217 = vmatprep.subr.mxu0 0.0
    %218 = vmatpush1.msra.mxu0 %v188
    %219 = vmatprep.subr.mxu0 0.0
    %220 = vmatpush1.msra.mxu0 %v189
    %221 = vmatprep.subr.mxu0 0.0
    %222 = vmatpush1.msra.mxu0 %v190
    %223 = vmatprep.subr.mxu0 0.0
    %224 = vmatpush1.msra.mxu0 %v191
    %225 = vmatprep.subr.mxu0 0.0
    %226 = vmatpush1.msra.mxu0 %v192
    %227 = vmatprep.subr.mxu0 0.0
    %228 = vmatpush1.msra.mxu0 %v193
    %229 = vmatprep.subr.mxu0 0.0
    %230 = vmatpush1.msra.mxu0 %v194
    %231 = vmatprep.subr.mxu0 0.0
    %232 = vmatpush1.msra.mxu0 %v195
    %233 = vmatprep.subr.mxu0 0.0
    %234 = vmatpush1.msra.mxu0 %v196
    %235 = vmatprep.subr.mxu0 0.0
    %236 = vmatpush1.msra.mxu0 %v197
    %237 = vmatprep.subr.mxu0 0.0
    %238 = vmatpush1.msra.mxu0 0.0
    %239 = vmatprep.subr.mxu0 0.0
    %240 = vmatpush1.msra.mxu0 0.0
    %241 = vmatprep.subr.mxu0 0.0
    %242 = vmatpush1.msra.mxu0 0.0
    %243 = vmatprep.subr.mxu0 0.0
    %244 = vmatpush1.msra.mxu0 0.0
    %245 = vmatprep.subr.mxu0 0.0
    %246 = vmatpush1.msra.mxu0 0.0
    %247 = vmatprep.subr.mxu0 0.0
    %248 = vmatpush1.msra.mxu0 0.0
    %249 = vmatprep.subr.mxu0 0.0
    %250 = vmatpush1.msra.mxu0 0.0
    %251 = vmatprep.subr.mxu0 0.0
    %252 = vmatpush1.msra.mxu0 0.0
    %253 = vmatprep.subr.mxu0 0.0
    %254 = vmatpush1.msra.mxu0 0.0
    %255 = vmatprep.subr.mxu0 0.0
    %256 = vmatpush1.msra.mxu0 0.0
    %257 = vmatprep.subr.mxu0 0.0
    %258 = vmatpush1.msra.mxu0 0.0
    %259 = vmatprep.subr.mxu0 0.0
    %260 = vmatpush1.msra.mxu0 0.0
    %261 = vmatprep.subr.mxu0 0.0
    %262 = vmatpush1.msra.mxu0 0.0
    %263 = vmatprep.subr.mxu0 0.0
    %264 = vmatpush1.msra.mxu0 0.0
    %265 = vmatprep.subr.mxu0 0.0
    %266 = vmatpush1.msra.mxu0 0.0
    %267 = vmatprep.subr.mxu0 0.0
    %268 = vmatpush1.msra.mxu0 0.0
    %269 = vmatprep.mubr.f32.mxu0 0.0
    %270 = vmatmul.mubr.f32.gmra.mrb[0].mxu0 %v180
    %v271 = vpop.f32.mrb[0].mxu0
    %v272 = vadd.f32 %v203, %v271
    %v273 = vpop.f32.mrb[0].mxu0
    %274 = vmatprep.mubr.f32.mxu0 0.0
    %275 = vmatmul.mubr.f32.gmra.mrb[0].mxu0 %v181
    %v276 = vpop.f32.mrb[0].mxu0
    %v277 = vadd.f32 %v203, %v276
    %v278 = vpop.f32.mrb[0].mxu0
    %279 = vdwg.mxu0
    %v280 = vmax.f32 %v272, 0.0
    %v281 = vmax.f32 %v277, 0.0
    %282 = vst [vmem:[#allocation11] sm:$0xff] %v280
    %283 = vst [vmem:[#allocation11 + $0x8] sm:$0xff] %v281
    %v284 = vld [vmem:[#allocation8] sm:$0xff]
    %v285 = vld [vmem:[#allocation8 + $0x8] sm:$0xff]
    %v286 = vld [vmem:[#allocation8 + $0x10] sm:$0xff]
    %v287 = vld [vmem:[#allocation8 + $0x18] sm:$0xff]
    %v288 = vld [vmem:[#allocation8 + $0x20] sm:$0xff]
    %v289 = vld [vmem:[#allocation8 + $0x28] sm:$0xff]
    %v290 = vld [vmem:[#allocation8 + $0x30] sm:$0xff]
    %v291 = vld [vmem:[#allocation8 + $0x38] sm:$0xff]
    %v292 = vld [vmem:[#allocation8 + $0x40] sm:$0xff]
    %v293 = vld [vmem:[#allocation8 + $0x48] sm:$0xff]
    %v294 = vld [vmem:[#allocation8 + $0x50] sm:$0xff]
    %v295 = vld [vmem:[#allocation8 + $0x58] sm:$0xff]
    %v296 = vld [vmem:[#allocation8 + $0x60] sm:$0xff]
    %v297 = vld [vmem:[#allocation8 + $0x68] sm:$0xff]
    %v298 = vld [vmem:[#allocation8 + $0x70] sm:$0xff]
    %v299 = vld [vmem:[#allocation8 + $0x78] sm:$0xff]
    %v300 = vld [vmem:[%s6] sm:$0x1]
    %v302 = vlaneseq
    %v303 = vshrl.u32 %v302, 7
    %v304 = vsub.s32 0, %v303
    %v305 = vrot.slane %v300, %v304
    %307 = vmatprep.subr.mxu0 0.0
    %308 = vmatpush1.msra.mxu0 %v284
    %309 = vmatprep.subr.mxu0 0.0
    %310 = vmatpush1.msra.mxu0 %v285
    %311 = vmatprep.subr.mxu0 0.0
    %312 = vmatpush1.msra.mxu0 %v286
    %313 = vmatprep.subr.mxu0 0.0
    %314 = vmatpush1.msra.mxu0 %v287
    %315 = vmatprep.subr.mxu0 0.0
    %316 = vmatpush1.msra.mxu0 %v288
    %317 = vmatprep.subr.mxu0 0.0
    %318 = vmatpush1.msra.mxu0 %v289
    %319 = vmatprep.subr.mxu0 0.0
    %320 = vmatpush1.msra.mxu0 %v290
    %321 = vmatprep.subr.mxu0 0.0
    %322 = vmatpush1.msra.mxu0 %v291
    %323 = vmatprep.subr.mxu0 0.0
    %324 = vmatpush1.msra.mxu0 %v292
    %325 = vmatprep.subr.mxu0 0.0
    %326 = vmatpush1.msra.mxu0 %v293
    %327 = vmatprep.subr.mxu0 0.0
    %328 = vmatpush1.msra.mxu0 %v294
    %329 = vmatprep.subr.mxu0 0.0
    %330 = vmatpush1.msra.mxu0 %v295
    %331 = vmatprep.subr.mxu0 0.0
    %332 = vmatpush1.msra.mxu0 %v296
    %333 = vmatprep.subr.mxu0 0.0
    %334 = vmatpush1.msra.mxu0 %v297
    %335 = vmatprep.subr.mxu0 0.0
    %336 = vmatpush1.msra.mxu0 %v298
    %337 = vmatprep.subr.mxu0 0.0
    %338 = vmatpush1.msra.mxu0 %v299
    %339 = vmatprep.subr.mxu0 0.0
    %340 = vmatpush1.msra.mxu0 0.0
    %341 = vmatprep.subr.mxu0 0.0
    %342 = vmatpush1.msra.mxu0 0.0
    %343 = vmatprep.subr.mxu0 0.0
    %344 = vmatpush1.msra.mxu0 0.0
    %345 = vmatprep.subr.mxu0 0.0
    %346 = vmatpush1.msra.mxu0 0.0
    %347 = vmatprep.subr.mxu0 0.0
    %348 = vmatpush1.msra.mxu0 0.0
    %349 = vmatprep.subr.mxu0 0.0
    %350 = vmatpush1.msra.mxu0 0.0
    %351 = vmatprep.subr.mxu0 0.0
    %352 = vmatpush1.msra.mxu0 0.0
    %353 = vmatprep.subr.mxu0 0.0
    %354 = vmatpush1.msra.mxu0 0.0
    %355 = vmatprep.subr.mxu0 0.0
    %356 = vmatpush1.msra.mxu0 0.0
    %357 = vmatprep.subr.mxu0 0.0
    %358 = vmatpush1.msra.mxu0 0.0
    %359 = vmatprep.subr.mxu0 0.0
    %360 = vmatpush1.msra.mxu0 0.0
    %361 = vmatprep.subr.mxu0 0.0
    %362 = vmatpush1.msra.mxu0 0.0
    %363 = vmatprep.subr.mxu0 0.0
    %364 = vmatpush1.msra.mxu0 0.0
    %365 = vmatprep.subr.mxu0 0.0
    %366 = vmatpush1.msra.mxu0 0.0
    %367 = vmatprep.subr.mxu0 0.0
    %368 = vmatpush1.msra.mxu0 0.0
    %369 = vmatprep.subr.mxu0 0.0
    %370 = vmatpush1.msra.mxu0 0.0
    %371 = vmatprep.mubr.f32.mxu0 0.0
    %372 = vmatmul.mubr.f32.gmra.mrb[0].mxu0 %v280
    %v373 = vpop.f32.mrb[0].mxu0
    %v374 = vadd.f32 %v305, %v373
    %v375 = vpop.f32.mrb[0].mxu0
    %376 = vmatprep.mubr.f32.mxu0 0.0
    %377 = vmatmul.mubr.f32.gmra.mrb[0].mxu0 %v281
    %v378 = vpop.f32.mrb[0].mxu0
    %v379 = vadd.f32 %v305, %v378
    %v380 = vpop.f32.mrb[0].mxu0
    %381 = vdwg.mxu0
    %382 = vst [vmem:[#allocation10] sm:$0xff] %v374
    %383 = vst [vmem:[#allocation10 + $0x8] sm:$0xff] %v379
    // Predicated region
    $region46: #{tpu_custom_call.1} parent=1 // pred_check
      _
    $region47: #{tpu_custom_call.1} parent=1 // pred_check_branch
      %385 = sbr.rel (0) target = $region49
    $region48: #{tpu_custom_call.1} parent=1 // pred_region
      %s387 = ssub.s32 256, 256
      %388 = vsyncadd [#allocation4], %s387
      %s389 = sshll.u32 [#allocation10], 4
      %s390 = int_to_ptr.vmem [resolvable:$true] %s389
      %395 = dma.vmem_to_hbm [thread:$0]  %s390, 256, %s7, [#allocation4], 128, 128, 8
    $region49: #{tpu_custom_call.1} parent=1 // pred_fallthru
      _
    // Predicated region
    $region50: #{tpu_custom_call.1} parent=1 // pred_check
      _
    $region51: #{tpu_custom_call.1} parent=1 // pred_check_branch
      %397 = sbr.rel (0) target = $region53
    $region52: #{tpu_custom_call.1} parent=1 // pred_region
      %s399 = ssub.s32 256, 256
      %400 = vsyncadd [#allocation12], %s399
      %s401 = sshll.u32 [#allocation11], 4
      %s402 = int_to_ptr.vmem [resolvable:$true] %s401
      %407 = dma.vmem_to_hbm [thread:$0]  %s402, 256, %s8, [#allocation12], 128, 128, 8
    $region53: #{tpu_custom_call.1} parent=1 // pred_fallthru
      _
    // Predicated region
    $region54: #{tpu_custom_call.1} parent=1 // pred_check
      _
    $region55: #{tpu_custom_call.1} parent=1 // pred_check_branch
      %409 = sbr.rel (0) target = $region57
    $region56: #{tpu_custom_call.1} parent=1 // pred_region
      %410 = dma.done [#allocation4], 256
    $region57: #{tpu_custom_call.1} parent=1 // pred_fallthru
      _
    // Predicated region
    $region58: #{tpu_custom_call.1} parent=1 // pred_check
      _
    $region59: #{tpu_custom_call.1} parent=1 // pred_check_branch
      %412 = sbr.rel (0) target = $region61
    $region60: #{tpu_custom_call.1} parent=1 // pred_region
      %413 = dma.done [#allocation12], 256
    $region61: #{tpu_custom_call.1} parent=1 // pred_fallthru
      _
    %414 = vsyncpa [#allocation3], 1
    %415 = vsyncpa [#allocation6], 1
    %416 = vsyncpa [#allocation9], 1
    %417 = vsyncpa [#allocation4], 1
    %418 = vsyncpa [#allocation12], 1

// kernel: tpu_custom_call.1
$region0: #{tpu_custom_call.1}
  #allocation0 [shape = 'u32[]', space=smem, size = 0x4, offset = 0x4, fixed_abs, tag = 'smem constant byte address 0x4 - core index']
  #allocation1 [shape = 'u32[144,128]{1,0:T(1,128)}', space=vmem, size = 0x12000, scoped, tag = 'internal scratch']
  %s0 = inlined_call_operand.hbm [shape: f32[16,32], index: 0, kind: input, shape index: {}]
  %s1 = inlined_call_operand.hbm [shape: f32[32,128], index: 1, kind: input, shape index: {}]
  %s2 = inlined_call_operand.vmem [shape: f32[1,128], index: 2, kind: input, shape index: {}]
  %s3 = inlined_call_operand.hbm [shape: f32[128,128], index: 3, kind: input, shape index: {}]
  %s4 = inlined_call_operand.vmem [shape: f32[1,128], index: 4, kind: input, shape index: {}]
  %s5 = inlined_call_operand.hbm [shape: f32[128,128], index: 5, kind: input, shape index: {}]
  %s6 = inlined_call_operand.vmem [shape: f32[1,128], index: 6, kind: input, shape index: {}]
  %s7 = inlined_call_operand.hbm [shape: f32[16,128], index: 7, kind: output, shape index: {0}]
  %s8 = inlined_call_operand.hbm [shape: f32[16,128], index: 8, kind: output, shape index: {1}]
  %9 = xla_tuple %s7, %s8
  %s10 = sld [smem:[#allocation0]]
  $region62: #{tpu_custom_call.1} parent=0
    _
  %s12 = ssub.s32 1, %s10
  %s13 = scalar_select 0, %s12, %s10
  $region1: #{tpu_custom_call.1} parent=0
    #allocation2 [shape = 'u8[8192]{0}', space=vmem, size = 0x2000, scoped, tag = 'input window, operand 0, single buffered']
    #allocation3 [shape = 's32[1]{0}', space=sflag, size = 0x4, scoped, tag = 'scoped memory for tpu_custom_call.1']
    #allocation4 [shape = 's32[1]{0}', space=sflag, size = 0x4, scoped, tag = 'scoped memory for tpu_custom_call.1']
    #allocation5 [shape = 'u8[16384]{0}', space=vmem, size = 0x4000, scoped, tag = 'input window, operand 1, single buffered']
    #allocation6 [shape = 's32[1]{0}', space=sflag, size = 0x4, scoped, tag = 'scoped memory for tpu_custom_call.1']
    #allocation7 [shape = 'u8[65536]{0}', space=vmem, size = 0x10000, scoped, tag = 'input window, operand 3, single buffered']
    #allocation8 [shape = 'u8[65536]{0}', space=vmem, size = 0x10000, scoped, tag = 'input window, operand 5, single buffered']
    #allocation9 [shape = 's32[1]{0}', space=sflag, size = 0x4, scoped, tag = 'scoped memory for tpu_custom_call.1']
    #allocation10 [shape = 'u8[8192]{0}', space=vmem, size = 0x2000, scoped, tag = 'output window, operand 0, single buffered']
    #allocation11 [shape = 'u8[8192]{0}', space=vmem, size = 0x2000, scoped, tag = 'output window, operand 1, single buffered']
    #allocation12 [shape = 's32[1]{0}', space=sflag, size = 0x4, scoped, tag = 'scoped memory for tpu_custom_call.1']
    %14 = vsyncpa [#allocation3], 0
    %15 = vsyncpa [#allocation6], 0
    %16 = vsyncpa [#allocation9], 0
    %17 = vsyncpa [#allocation4], 0
    %18 = vsyncpa [#allocation12], 0
    // Predicated region
    $region2: #{tpu_custom_call.1} parent=1 // pred_check
      _
    $region3: #{tpu_custom_call.1} parent=1 // pred_check_branch
      %20 = sbr.rel (0) target = $region5
    $region4: #{tpu_custom_call.1} parent=1 // pred_region
      %s22 = ssub.s32 256, 256
      %23 = vsyncadd [#allocation3], %s22
      %s24 = sshll.u32 [#allocation2], 4
      %s25 = int_to_ptr.vmem [resolvable:$true] %s24
      %30 = dma.hbm_to_vmem [thread:$0]  %s0, 256, %s25, [#allocation3], 128, 128, 8
    $region5: #{tpu_custom_call.1} parent=1 // pred_fallthru
      _
    // Predicated region
    $region6: #{tpu_custom_call.1} parent=1 // pred_check
      _
    $region7: #{tpu_custom_call.1} parent=1 // pred_check_branch
      %32 = sbr.rel (0) target = $region9
    $region8: #{tpu_custom_call.1} parent=1 // pred_region
      %s34 = ssub.s32 512, 512
      %35 = vsyncadd [#allocation6], %s34
      %s36 = sshll.u32 [#allocation5], 4
      %s37 = int_to_ptr.vmem [resolvable:$true] %s36
      %42 = dma.hbm_to_vmem [thread:$0]  %s1, 512, %s37, [#allocation6], 128, 128, 8
    $region9: #{tpu_custom_call.1} parent=1 // pred_fallthru
      _
    // Predicated region
    $region10: #{tpu_custom_call.1} parent=1 // pred_check
      _
    $region11: #{tpu_custom_call.1} parent=1 // pred_check_branch
      %44 = sbr.rel (0) target = $region13
    $region12: #{tpu_custom_call.1} parent=1 // pred_region
      _
    $region13: #{tpu_custom_call.1} parent=1 // pred_fallthru
      _
    // Predicated region
    $region14: #{tpu_custom_call.1} parent=1 // pred_check
      _
    $region15: #{tpu_custom_call.1} parent=1 // pred_check_branch
      %46 = sbr.rel (0) target = $region17
    $region16: #{tpu_custom_call.1} parent=1 // pred_region
      %s48 = ssub.s32 2048, 2048
      %49 = vsyncadd [#allocation6], %s48
      %s50 = sshll.u32 [#allocation7], 4
      %s51 = int_to_ptr.vmem [resolvable:$true] %s50
      %56 = dma.hbm_to_vmem [thread:$0]  %s3, 2048, %s51, [#allocation6], 128, 128, 8
    $region17: #{tpu_custom_call.1} parent=1 // pred_fallthru
      _
    // Predicated region
    $region18: #{tpu_custom_call.1} parent=1 // pred_check
      _
    $region19: #{tpu_custom_call.1} parent=1 // pred_check_branch
      %58 = sbr.rel (0) target = $region21
    $region20: #{tpu_custom_call.1} parent=1 // pred_region
      _
    $region21: #{tpu_custom_call.1} parent=1 // pred_fallthru
      _
    // Predicated region
    $region22: #{tpu_custom_call.1} parent=1 // pred_check
      _
    $region23: #{tpu_custom_call.1} parent=1 // pred_check_branch
      %60 = sbr.rel (0) target = $region25
    $region24: #{tpu_custom_call.1} parent=1 // pred_region
      %s62 = ssub.s32 2048, 2048
      %63 = vsyncadd [#allocation9], %s62
      %s64 = sshll.u32 [#allocation8], 4
      %s65 = int_to_ptr.vmem [resolvable:$true] %s64
      %70 = dma.hbm_to_vmem [thread:$0]  %s5, 2048, %s65, [#allocation9], 128, 128, 8
    $region25: #{tpu_custom_call.1} parent=1 // pred_fallthru
      _
    // Predicated region
    $region26: #{tpu_custom_call.1} parent=1 // pred_check
      _
    $region27: #{tpu_custom_call.1} parent=1 // pred_check_branch
      %72 = sbr.rel (0) target = $region29
    $region28: #{tpu_custom_call.1} parent=1 // pred_region
      _
    $region29: #{tpu_custom_call.1} parent=1 // pred_fallthru
      _
    // Predicated region
    $region30: #{tpu_custom_call.1} parent=1 // pred_check
      _
    $region31: #{tpu_custom_call.1} parent=1 // pred_check_branch
      %74 = sbr.rel (0) target = $region33
    $region32: #{tpu_custom_call.1} parent=1 // pred_region
      %75 = dma.done [#allocation3], 256
    $region33: #{tpu_custom_call.1} parent=1 // pred_fallthru
      _
    // Predicated region
    $region34: #{tpu_custom_call.1} parent=1 // pred_check
      _
    $region35: #{tpu_custom_call.1} parent=1 // pred_check_branch
      %77 = sbr.rel (0) target = $region37
    $region36: #{tpu_custom_call.1} parent=1 // pred_region
      %78 = dma.done [#allocation6], 512
    $region37: #{tpu_custom_call.1} parent=1 // pred_fallthru
      _
    // Predicated region
    $region38: #{tpu_custom_call.1} parent=1 // pred_check
      _
    $region39: #{tpu_custom_call.1} parent=1 // pred_check_branch
      %80 = sbr.rel (0) target = $region41
    $region40: #{tpu_custom_call.1} parent=1 // pred_region
      %81 = dma.done [#allocation6], 2048
    $region41: #{tpu_custom_call.1} parent=1 // pred_fallthru
      _
    // Predicated region
    $region42: #{tpu_custom_call.1} parent=1 // pred_check
      _
    $region43: #{tpu_custom_call.1} parent=1 // pred_check_branch
      %83 = sbr.rel (0) target = $region45
    $region44: #{tpu_custom_call.1} parent=1 // pred_region
      %84 = dma.done [#allocation9], 2048
    $region45: #{tpu_custom_call.1} parent=1 // pred_fallthru
      _
    %v85 = vld [vmem:[#allocation2] sm:$0xff]
    %v86 = vld [vmem:[#allocation2 + $0x8] sm:$0xff]
    %v87 = vld [vmem:[#allocation5] sm:$0xff]
    %v88 = vld [vmem:[#allocation5 + $0x8] sm:$0xff]
    %v89 = vld [vmem:[#allocation5 + $0x10] sm:$0xff]
    %v90 = vld [vmem:[#allocation5 + $0x18] sm:$0xff]
    %v91 = vld [vmem:[%s2] sm:$0x1]
    %v93 = vlaneseq
    %v94 = vshrl.u32 %v93, 7
    %v95 = vsub.s32 0, %v94
    %v96 = vrot.slane %v91, %v95
    %vm98 = vcmask 261120
    %v100 = vsel %vm98, %v85, 0
    %v103 = vsel %vm98, %v86, 0
    %105 = vmatprep.subr.mxu0 0.0
    %106 = vmatpush1.msra.mxu0 %v87
    %107 = vmatprep.subr.mxu0 0.0
    %108 = vmatpush1.msra.mxu0 %v88
    %109 = vmatprep.subr.mxu0 0.0
    %110 = vmatpush1.msra.mxu0 %v89
    %111 = vmatprep.subr.mxu0 0.0
    %112 = vmatpush1.msra.mxu0 %v90
    %113 = vmatprep.subr.mxu0 0.0
    %114 = vmatpush1.msra.mxu0 0.0
    %115 = vmatprep.subr.mxu0 0.0
    %116 = vmatpush1.msra.mxu0 0.0
    %117 = vmatprep.subr.mxu0 0.0
    %118 = vmatpush1.msra.mxu0 0.0
    %119 = vmatprep.subr.mxu0 0.0
    %120 = vmatpush1.msra.mxu0 0.0
    %121 = vmatprep.subr.mxu0 0.0
    %122 = vmatpush1.msra.mxu0 0.0
    %123 = vmatprep.subr.mxu0 0.0
    %124 = vmatpush1.msra.mxu0 0.0
    %125 = vmatprep.subr.mxu0 0.0
    %126 = vmatpush1.msra.mxu0 0.0
    %127 = vmatprep.subr.mxu0 0.0
    %128 = vmatpush1.msra.mxu0 0.0
    %129 = vmatprep.subr.mxu0 0.0
    %130 = vmatpush1.msra.mxu0 0.0
    %131 = vmatprep.subr.mxu0 0.0
    %132 = vmatpush1.msra.mxu0 0.0
    %133 = vmatprep.subr.mxu0 0.0
    %134 = vmatpush1.msra.mxu0 0.0
    %135 = vmatprep.subr.mxu0 0.0
    %136 = vmatpush1.msra.mxu0 0.0
    %137 = vmatprep.subr.mxu0 0.0
    %138 = vmatpush1.msra.mxu0 0.0
    %139 = vmatprep.subr.mxu0 0.0
    %140 = vmatpush1.msra.mxu0 0.0
    %141 = vmatprep.subr.mxu0 0.0
    %142 = vmatpush1.msra.mxu0 0.0
    %143 = vmatprep.subr.mxu0 0.0
    %144 = vmatpush1.msra.mxu0 0.0
    %145 = vmatprep.subr.mxu0 0.0
    %146 = vmatpush1.msra.mxu0 0.0
    %147 = vmatprep.subr.mxu0 0.0
    %148 = vmatpush1.msra.mxu0 0.0
    %149 = vmatprep.subr.mxu0 0.0
    %150 = vmatpush1.msra.mxu0 0.0
    %151 = vmatprep.subr.mxu0 0.0
    %152 = vmatpush1.msra.mxu0 0.0
    %153 = vmatprep.subr.mxu0 0.0
    %154 = vmatpush1.msra.mxu0 0.0
    %155 = vmatprep.subr.mxu0 0.0
    %156 = vmatpush1.msra.mxu0 0.0
    %157 = vmatprep.subr.mxu0 0.0
    %158 = vmatpush1.msra.mxu0 0.0
    %159 = vmatprep.subr.mxu0 0.0
    %160 = vmatpush1.msra.mxu0 0.0
    %161 = vmatprep.subr.mxu0 0.0
    %162 = vmatpush1.msra.mxu0 0.0
    %163 = vmatprep.subr.mxu0 0.0
    %164 = vmatpush1.msra.mxu0 0.0
    %165 = vmatprep.subr.mxu0 0.0
    %166 = vmatpush1.msra.mxu0 0.0
    %167 = vmatprep.subr.mxu0 0.0
    %168 = vmatpush1.msra.mxu0 0.0
    %169 = vmatprep.mubr.f32.mxu0 0.0
    %170 = vmatmul.mubr.f32.gmra.mrb[0].mxu0 %v100
    %v171 = vpop.f32.mrb[0].mxu0
    %v172 = vadd.f32 %v96, %v171
    %v173 = vpop.f32.mrb[0].mxu0
    %174 = vmatprep.mubr.f32.mxu0 0.0
    %175 = vmatmul.mubr.f32.gmra.mrb[0].mxu0 %v103
    %v176 = vpop.f32.mrb[0].mxu0
    %v177 = vadd.f32 %v96, %v176
    %v178 = vpop.f32.mrb[0].mxu0
    %179 = vdwg.mxu0
    %v180 = vmax.f32 %v172, 0.0
    %v181 = vmax.f32 %v177, 0.0
    %v182 = vld [vmem:[#allocation7] sm:$0xff]
    %v183 = vld [vmem:[#allocation7 + $0x8] sm:$0xff]
    %v184 = vld [vmem:[#allocation7 + $0x10] sm:$0xff]
    %v185 = vld [vmem:[#allocation7 + $0x18] sm:$0xff]
    %v186 = vld [vmem:[#allocation7 + $0x20] sm:$0xff]
    %v187 = vld [vmem:[#allocation7 + $0x28] sm:$0xff]
    %v188 = vld [vmem:[#allocation7 + $0x30] sm:$0xff]
    %v189 = vld [vmem:[#allocation7 + $0x38] sm:$0xff]
    %v190 = vld [vmem:[#allocation7 + $0x40] sm:$0xff]
    %v191 = vld [vmem:[#allocation7 + $0x48] sm:$0xff]
    %v192 = vld [vmem:[#allocation7 + $0x50] sm:$0xff]
    %v193 = vld [vmem:[#allocation7 + $0x58] sm:$0xff]
    %v194 = vld [vmem:[#allocation7 + $0x60] sm:$0xff]
    %v195 = vld [vmem:[#allocation7 + $0x68] sm:$0xff]
    %v196 = vld [vmem:[#allocation7 + $0x70] sm:$0xff]
    %v197 = vld [vmem:[#allocation7 + $0x78] sm:$0xff]
    %v198 = vld [vmem:[%s4] sm:$0x1]
    %v200 = vlaneseq
    %v201 = vshrl.u32 %v200, 7
    %v202 = vsub.s32 0, %v201
    %v203 = vrot.slane %v198, %v202
    %205 = vmatprep.subr.mxu0 0.0
    %206 = vmatpush1.msra.mxu0 %v182
    %207 = vmatprep.subr.mxu0 0.0
    %208 = vmatpush1.msra.mxu0 %v183
    %209 = vmatprep.subr.mxu0 0.0
    %210 = vmatpush1.msra.mxu0 %v184
    %211 = vmatprep.subr.mxu0 0.0
    %212 = vmatpush1.msra.mxu0 %v185
    %213 = vmatprep.subr.mxu0 0.0
    %214 = vmatpush1.msra.mxu0 %v186
    %215 = vmatprep.subr.mxu0 0.0
    %216 = vmatpush1.msra.mxu0 %v187
    %217 = vmatprep.subr.mxu0 0.0
    %218 = vmatpush1.msra.mxu0 %v188
    %219 = vmatprep.subr.mxu0 0.0
    %220 = vmatpush1.msra.mxu0 %v189
    %221 = vmatprep.subr.mxu0 0.0
    %222 = vmatpush1.msra.mxu0 %v190
    %223 = vmatprep.subr.mxu0 0.0
    %224 = vmatpush1.msra.mxu0 %v191
    %225 = vmatprep.subr.mxu0 0.0
    %226 = vmatpush1.msra.mxu0 %v192
    %227 = vmatprep.subr.mxu0 0.0
    %228 = vmatpush1.msra.mxu0 %v193
    %229 = vmatprep.subr.mxu0 0.0
    %230 = vmatpush1.msra.mxu0 %v194
    %231 = vmatprep.subr.mxu0 0.0
    %232 = vmatpush1.msra.mxu0 %v195
    %233 = vmatprep.subr.mxu0 0.0
    %234 = vmatpush1.msra.mxu0 %v196
    %235 = vmatprep.subr.mxu0 0.0
    %236 = vmatpush1.msra.mxu0 %v197
    %237 = vmatprep.subr.mxu0 0.0
    %238 = vmatpush1.msra.mxu0 0.0
    %239 = vmatprep.subr.mxu0 0.0
    %240 = vmatpush1.msra.mxu0 0.0
    %241 = vmatprep.subr.mxu0 0.0
    %242 = vmatpush1.msra.mxu0 0.0
    %243 = vmatprep.subr.mxu0 0.0
    %244 = vmatpush1.msra.mxu0 0.0
    %245 = vmatprep.subr.mxu0 0.0
    %246 = vmatpush1.msra.mxu0 0.0
    %247 = vmatprep.subr.mxu0 0.0
    %248 = vmatpush1.msra.mxu0 0.0
    %249 = vmatprep.subr.mxu0 0.0
    %250 = vmatpush1.msra.mxu0 0.0
    %251 = vmatprep.subr.mxu0 0.0
    %252 = vmatpush1.msra.mxu0 0.0
    %253 = vmatprep.subr.mxu0 0.0
    %254 = vmatpush1.msra.mxu0 0.0
    %255 = vmatprep.subr.mxu0 0.0
    %256 = vmatpush1.msra.mxu0 0.0
    %257 = vmatprep.subr.mxu0 0.0
    %258 = vmatpush1.msra.mxu0 0.0
    %259 = vmatprep.subr.mxu0 0.0
    %260 = vmatpush1.msra.mxu0 0.0
    %261 = vmatprep.subr.mxu0 0.0
    %262 = vmatpush1.msra.mxu0 0.0
    %263 = vmatprep.subr.mxu0 0.0
    %264 = vmatpush1.msra.mxu0 0.0
    %265 = vmatprep.subr.mxu0 0.0
    %266 = vmatpush1.msra.mxu0 0.0
    %267 = vmatprep.subr.mxu0 0.0
    %268 = vmatpush1.msra.mxu0 0.0
    %269 = vmatprep.mubr.f32.mxu0 0.0
    %270 = vmatmul.mubr.f32.gmra.mrb[0].mxu0 %v180
    %v271 = vpop.f32.mrb[0].mxu0
    %v272 = vadd.f32 %v203, %v271
    %v273 = vpop.f32.mrb[0].mxu0
    %274 = vmatprep.mubr.f32.mxu0 0.0
    %275 = vmatmul.mubr.f32.gmra.mrb[0].mxu0 %v181
    %v276 = vpop.f32.mrb[0].mxu0
    %v277 = vadd.f32 %v203, %v276
    %v278 = vpop.f32.mrb[0].mxu0
    %279 = vdwg.mxu0
    %v280 = vmax.f32 %v272, 0.0
    %v281 = vmax.f32 %v277, 0.0
    %282 = vst [vmem:[#allocation11] sm:$0xff] %v280
    %283 = vst [vmem:[#allocation11 + $0x8] sm:$0xff] %v281
    %v284 = vld [vmem:[#allocation8] sm:$0xff]
    %v285 = vld [vmem:[#allocation8 + $0x8] sm:$0xff]
    %v286 = vld [vmem:[#allocation8 + $0x10] sm:$0xff]
    %v287 = vld [vmem:[#allocation8 + $0x18] sm:$0xff]
    %v288 = vld [vmem:[#allocation8 + $0x20] sm:$0xff]
    %v289 = vld [vmem:[#allocation8 + $0x28] sm:$0xff]
    %v290 = vld [vmem:[#allocation8 + $0x30] sm:$0xff]
    %v291 = vld [vmem:[#allocation8 + $0x38] sm:$0xff]
    %v292 = vld [vmem:[#allocation8 + $0x40] sm:$0xff]
    %v293 = vld [vmem:[#allocation8 + $0x48] sm:$0xff]
    %v294 = vld [vmem:[#allocation8 + $0x50] sm:$0xff]
    %v295 = vld [vmem:[#allocation8 + $0x58] sm:$0xff]
    %v296 = vld [vmem:[#allocation8 + $0x60] sm:$0xff]
    %v297 = vld [vmem:[#allocation8 + $0x68] sm:$0xff]
    %v298 = vld [vmem:[#allocation8 + $0x70] sm:$0xff]
    %v299 = vld [vmem:[#allocation8 + $0x78] sm:$0xff]
    %v300 = vld [vmem:[%s6] sm:$0x1]
    %v302 = vlaneseq
    %v303 = vshrl.u32 %v302, 7
    %v304 = vsub.s32 0, %v303
    %v305 = vrot.slane %v300, %v304
    %307 = vmatprep.subr.mxu0 0.0
    %308 = vmatpush1.msra.mxu0 %v284
    %309 = vmatprep.subr.mxu0 0.0
    %310 = vmatpush1.msra.mxu0 %v285
    %311 = vmatprep.subr.mxu0 0.0
    %312 = vmatpush1.msra.mxu0 %v286
    %313 = vmatprep.subr.mxu0 0.0
    %314 = vmatpush1.msra.mxu0 %v287
    %315 = vmatprep.subr.mxu0 0.0
    %316 = vmatpush1.msra.mxu0 %v288
    %317 = vmatprep.subr.mxu0 0.0
    %318 = vmatpush1.msra.mxu0 %v289
    %319 = vmatprep.subr.mxu0 0.0
    %320 = vmatpush1.msra.mxu0 %v290
    %321 = vmatprep.subr.mxu0 0.0
    %322 = vmatpush1.msra.mxu0 %v291
    %323 = vmatprep.subr.mxu0 0.0
    %324 = vmatpush1.msra.mxu0 %v292
    %325 = vmatprep.subr.mxu0 0.0
    %326 = vmatpush1.msra.mxu0 %v293
    %327 = vmatprep.subr.mxu0 0.0
    %328 = vmatpush1.msra.mxu0 %v294
    %329 = vmatprep.subr.mxu0 0.0
    %330 = vmatpush1.msra.mxu0 %v295
    %331 = vmatprep.subr.mxu0 0.0
    %332 = vmatpush1.msra.mxu0 %v296
    %333 = vmatprep.subr.mxu0 0.0
    %334 = vmatpush1.msra.mxu0 %v297
    %335 = vmatprep.subr.mxu0 0.0
    %336 = vmatpush1.msra.mxu0 %v298
    %337 = vmatprep.subr.mxu0 0.0
    %338 = vmatpush1.msra.mxu0 %v299
    %339 = vmatprep.subr.mxu0 0.0
    %340 = vmatpush1.msra.mxu0 0.0
    %341 = vmatprep.subr.mxu0 0.0
    %342 = vmatpush1.msra.mxu0 0.0
    %343 = vmatprep.subr.mxu0 0.0
    %344 = vmatpush1.msra.mxu0 0.0
    %345 = vmatprep.subr.mxu0 0.0
    %346 = vmatpush1.msra.mxu0 0.0
    %347 = vmatprep.subr.mxu0 0.0
    %348 = vmatpush1.msra.mxu0 0.0
    %349 = vmatprep.subr.mxu0 0.0
    %350 = vmatpush1.msra.mxu0 0.0
    %351 = vmatprep.subr.mxu0 0.0
    %352 = vmatpush1.msra.mxu0 0.0
    %353 = vmatprep.subr.mxu0 0.0
    %354 = vmatpush1.msra.mxu0 0.0
    %355 = vmatprep.subr.mxu0 0.0
    %356 = vmatpush1.msra.mxu0 0.0
    %357 = vmatprep.subr.mxu0 0.0
    %358 = vmatpush1.msra.mxu0 0.0
    %359 = vmatprep.subr.mxu0 0.0
    %360 = vmatpush1.msra.mxu0 0.0
    %361 = vmatprep.subr.mxu0 0.0
    %362 = vmatpush1.msra.mxu0 0.0
    %363 = vmatprep.subr.mxu0 0.0
    %364 = vmatpush1.msra.mxu0 0.0
    %365 = vmatprep.subr.mxu0 0.0
    %366 = vmatpush1.msra.mxu0 0.0
    %367 = vmatprep.subr.mxu0 0.0
    %368 = vmatpush1.msra.mxu0 0.0
    %369 = vmatprep.subr.mxu0 0.0
    %370 = vmatpush1.msra.mxu0 0.0
    %371 = vmatprep.mubr.f32.mxu0 0.0
    %372 = vmatmul.mubr.f32.gmra.mrb[0].mxu0 %v280
    %v373 = vpop.f32.mrb[0].mxu0
    %v374 = vadd.f32 %v305, %v373
    %v375 = vpop.f32.mrb[0].mxu0
    %376 = vmatprep.mubr.f32.mxu0 0.0
    %377 = vmatmul.mubr.f32.gmra.mrb[0].mxu0 %v281
    %v378 = vpop.f32.mrb[0].mxu0
    %v379 = vadd.f32 %v305, %v378
    %v380 = vpop.f32.mrb[0].mxu0
    %381 = vdwg.mxu0
    %382 = vst [vmem:[#allocation10] sm:$0xff] %v374
    %383 = vst [vmem:[#allocation10 + $0x8] sm:$0xff] %v379
    // Predicated region
    $region46: #{tpu_custom_call.1} parent=1 // pred_check
      _
    $region47: #{tpu_custom_call.1} parent=1 // pred_check_branch
      %385 = sbr.rel (0) target = $region49
    $region48: #{tpu_custom_call.1} parent=1 // pred_region
      %s387 = ssub.s32 256, 256
      %388 = vsyncadd [#allocation4], %s387
      %s389 = sshll.u32 [#allocation10], 4
      %s390 = int_to_ptr.vmem [resolvable:$true] %s389
      %395 = dma.vmem_to_hbm [thread:$0]  %s390, 256, %s7, [#allocation4], 128, 128, 8
    $region49: #{tpu_custom_call.1} parent=1 // pred_fallthru
      _
    // Predicated region
    $region50: #{tpu_custom_call.1} parent=1 // pred_check
      _
    $region51: #{tpu_custom_call.1} parent=1 // pred_check_branch
      %397 = sbr.rel (0) target = $region53
    $region52: #{tpu_custom_call.1} parent=1 // pred_region
      %s399 = ssub.s32 256, 256
      %400 = vsyncadd [#allocation12], %s399
      %s401 = sshll.u32 [#allocation11], 4
      %s402 = int_to_ptr.vmem [resolvable:$true] %s401
      %407 = dma.vmem_to_hbm [thread:$0]  %s402, 256, %s8, [#allocation12], 128, 128, 8
    $region53: #{tpu_custom_call.1} parent=1 // pred_fallthru
      _
    // Predicated region
    $region54: #{tpu_custom_call.1} parent=1 // pred_check
      _
    $region55: #{tpu_custom_call.1} parent=1 // pred_check_branch
      %409 = sbr.rel (0) target = $region57
    $region56: #{tpu_custom_call.1} parent=1 // pred_region
      %410 = dma.done [#allocation4], 256
    $region57: #{tpu_custom_call.1} parent=1 // pred_fallthru
      _
    // Predicated region
    $region58: #{tpu_custom_call.1} parent=1 // pred_check
      _
    $region59: #{tpu_custom_call.1} parent=1 // pred_check_branch
      %412 = sbr.rel (0) target = $region61
    $region60: #{tpu_custom_call.1} parent=1 // pred_region
      %413 = dma.done [#allocation12], 256
    $region61: #{tpu_custom_call.1} parent=1 // pred_fallthru
      _
    %414 = vsyncpa [#allocation3], 1
    %415 = vsyncpa [#allocation6], 1
    %416 = vsyncpa [#allocation9], 1
    %417 = vsyncpa [#allocation4], 1
    %418 = vsyncpa [#allocation12], 1

</llo_original>
